<compile_context>
chip_gen: v5e
topology: v5e:2x2
jax: 0.10.0
libtpu: 0.0.40
codegen_flags: <defaults>
</compile_context>

<pallas_src>
import math

import jax
import jax.numpy as jnp
from jax.experimental import pallas as pl
from jax.experimental.pallas import tpu as pltpu


def _round_up(x: int, m: int) -> int:
    return ((x + m - 1) // m) * m


def _largest_divisor_tile(total: int, cap: int, unit: int = 128) -> int:
    """Largest multiple of `unit` that divides `total` (itself a multiple of
    `unit`), capped at `cap`.  Used so TK/TN divide the padded dims exactly."""
    if total <= cap:
        return total
    best = unit
    t = unit
    while t <= cap:
        if total % t == 0:
            best = t
        t += unit
    return best


def _pick_tm(n: int) -> int:
    """Batch tile: sublane-full (multiple of 8), large but with modest padding."""
    if n <= 256:
        return _round_up(n, 8)
    for cand in (256, 128, 64, 32):
        if _round_up(n, cand) - n <= cand // 8:
            return cand
    return 64


def _vmem_limit_bytes() -> int:
    """~70% of physical VMEM, clamped to a range safe on v5e/v6e/v7x."""
    cap = 64 * 1024 * 1024
    try:
        info = pltpu.get_tpu_info()
        cap = int(getattr(info, "vmem_capacity_bytes", cap))
    except Exception:
        pass
    return int(min(max(int(cap * 0.7), 32 * 1024 * 1024), 100 * 1024 * 1024))


def _temp_scaled_linear_kernel(x_ref, w_ref, b_ref, t_ref, o_ref):
    """One (i, j, k) grid step of out = (x @ W + b) / T.

    x_ref: (TM, TK) VMEM f32   (cast to compute dtype per-tile, in-register)
    w_ref: (TK, TN) VMEM compute dtype (bf16 or f32)
    b_ref: (1,  TN) VMEM f32
    t_ref: (1,)     SMEM f32 temperature (whole array, unblocked)
    o_ref: (TM, TN) VMEM f32 output block, resident across the K axis
    """
    k = pl.program_id(2)

    @pl.when(k == 0)
    def _init():
        o_ref[...] = jnp.zeros_like(o_ref)

    # Accumulate directly into the f32 output block (its index is independent
    # of k, so it stays VMEM-resident across the reduction).
    o_ref[...] += jnp.dot(
        x_ref[...].astype(w_ref.dtype),
        w_ref[...],
        preferred_element_type=jnp.float32,
    )

    @pl.when(k == pl.num_programs(2) - 1)
    def _finalize():
        inv_t = 1.0 / t_ref[0]          # scalar; epilogue stays f32 on the VPU
        o_ref[...] = (o_ref[...] + b_ref[...]) * inv_t


def prepare_temperature_head(weight, bias, *, compute_dtype=jnp.bfloat16):
    """ONE-TIME setup: pad + cast the classifier-head parameters.

    weight: (D, num_classes)  ->  (D_pad, C_pad) compute_dtype
    bias:   (num_classes,)    ->  (1, C_pad)     float32
    Padding to multiples of 128 gives lane-dense, unmasked stores and full MXU
    tiles; zero padding contributes nothing to the dot.
    """
    D, num_classes = weight.shape
    D_pad = _round_up(D, 128)
    C_pad = _round_up(num_classes, 128)
    w_p = jnp.pad(
        weight.astype(compute_dtype), ((0, D_pad - D), (0, C_pad - num_classes))
    )
    b_p = jnp.pad(
        bias.astype(jnp.float32), (0, C_pad - num_classes)
    ).reshape(1, C_pad)
    return w_p, b_p


def model_with_temperature_forward(x_nchw, w_p, b_p, temperature, num_classes):
    """Forward pass of ModelWithTemperature: (x.view(N,-1) @ W + b) / T.

    x_nchw: (N, C, H, W) float32 activations (unpadded, uncast)
    w_p:    (D_pad, C_pad) pre-padded/pre-cast weight from prepare_temperature_head
    b_p:    (1, C_pad)     pre-padded f32 bias
    returns (N, num_classes) float32
    """
    N = x_nchw.shape[0]
    D = math.prod(x_nchw.shape[1:])
    D_pad, C_pad = w_p.shape

    # ---- tile sizes -------------------------------------------------------
    TN = _largest_divisor_tile(C_pad, 512)    # lane-dense class tile
    TK = _largest_divisor_tile(D_pad, 2048)   # big K chunks -> long DMA bursts
    TM = _pick_tm(N)
    # v7x megacore: if classes fit one tile (j extent 1), try to expose >= 2
    # batch blocks so the second TensorCore gets work.
    if C_pad == TN and N >= 16 and _round_up(N, TM) // TM < 2:
        TM = _round_up(-(-N // 2), 8)
    N_pad = _round_up(N, TM)

    # ---- per-call activation prep (f32, pad only what is needed) ----------
    x2d = x_nchw.reshape(N, D).astype(jnp.float32)
    if (N_pad - N) or (D_pad - D):
        x2d = jnp.pad(x2d, ((0, N_pad - N), (0, D_pad - D)))
    t = jnp.asarray(temperature, jnp.float32).reshape(1)

    grid = (N_pad // TM, C_pad // TN, D_pad // TK)

    w_bytes = jnp.dtype(w_p.dtype).itemsize
    cost = pl.CostEstimate(
        flops=2 * N_pad * D_pad * C_pad,
        transcendentals=0,
        bytes_accessed=(
            N_pad * D_pad * 4 * (C_pad // TN)        # x re-read per class tile
            + D_pad * C_pad * w_bytes * (N_pad // TM)  # W re-read per batch tile
            + C_pad * 4 * (N_pad // TM)                # bias
            + N_pad * C_pad * 4                        # output write
        ),
    )

    out_p = pl.pallas_call(
        _temp_scaled_linear_kernel,
        out_shape=jax.ShapeDtypeStruct((N_pad, C_pad), jnp.float32),
        grid_spec=pltpu.PrefetchScalarGridSpec(
            num_scalar_prefetch=0,
            grid=grid,
            in_specs=[
                pl.BlockSpec((TM, TK), lambda i, j, k: (i, k)),      # x tile (f32)
                pl.BlockSpec((TK, TN), lambda i, j, k: (k, j)),      # W tile
                pl.BlockSpec((1, TN), lambda i, j, k: (0, j)),       # bias tile
                pl.BlockSpec(memory_space=pltpu.MemorySpace.SMEM),   # temperature
            ],
            out_specs=pl.BlockSpec((TM, TN), lambda i, j, k: (i, j)),
        ),
        compiler_params=pltpu.CompilerParams(
            dimension_semantics=("parallel", "parallel", "arbitrary"),
            vmem_limit_bytes=_vmem_limit_bytes(),
        ),
        cost_estimate=cost,
    )(x2d, w_p, b_p, t)

    # Slice off batch-row and class-lane padding.
    return out_p[:N, :num_classes]


if __name__ == "__main__":
    key = jax.random.PRNGKey(0)
    kx, kw, kb = jax.random.split(key, 3)

    # Small shapes consistent with an image-classification wrapped model.
    N, C, H, W = 2, 4, 16, 16
    num_classes = 10
    D = C * H * W

    x = jax.random.normal(kx, (N, C, H, W), dtype=jnp.float32)
    weight = jax.random.normal(kw, (D, num_classes), dtype=jnp.float32) * 0.02
    bias = jax.random.normal(kb, (num_classes,), dtype=jnp.float32) * 0.01

    # ModelWithTemperature.__init__ sets temperature = 1.0; use a non-trivial
    # value so the scaling path is actually exercised.
    temperature = 1.5

    ref = (x.reshape(N, D) @ weight + bias) / temperature

    # One-time head setup (bf16 MXU path), then the fused forward.
    w_bf16, b_f32 = prepare_temperature_head(weight, bias)
    out = model_with_temperature_forward(x, w_bf16, b_f32, temperature, num_classes)
    out = jax.block_until_ready(out)
    assert out.shape == (N, num_classes)
    assert jnp.allclose(out, ref, atol=2e-2, rtol=2e-2)

    # f32 compute path: tight check of the fused kernel semantics.
    w_f32, b_f32b = prepare_temperature_head(weight, bias, compute_dtype=jnp.float32)
    out_f32 = model_with_temperature_forward(
        x, w_f32, b_f32b, temperature, num_classes
    )
    out_f32 = jax.block_until_ready(out_f32)
    assert jnp.allclose(out_f32, ref, atol=1e-4, rtol=1e-4)

    # TODO(synk): ECELoss and set_temperature are offline calibration loops with
    # data-dependent boolean-mask binning / host-side grid search over T; they
    # are not part of the forward hot path and stay outside the kernel.
    print("KERNEL_OK")
</pallas_src>

<mosaic_0001>
module attributes {stable_mosaic.version = 11 : i64} {
  func.func @_temp_scaled_linear_kernel(%arg0: i32, %arg1: i32, %arg2: i32, %arg3: memref<8x1024xf32, #tpu.memory_space<vmem>>, %arg4: memref<1024x128xbf16, #tpu.memory_space<vmem>>, %arg5: memref<1x128xf32, #tpu.memory_space<vmem>>, %arg6: memref<1xf32, #tpu.memory_space<smem>>, %arg7: memref<8x128xf32, #tpu.memory_space<vmem>>) attributes {dimension_semantics = [#tpu.dimension_semantics<parallel>, #tpu.dimension_semantics<parallel>, #tpu.dimension_semantics<arbitrary>], iteration_bounds = array<i64: 1, 1, 1>, scalar_prefetch = 0 : i64, scratch_operands = 0 : i64, tpu.core_type = #tpu.core_type<tc>, window_params = [{transform_indices = @transform_0, window_bounds = array<i64: 8, 1024>}, {transform_indices = @transform_1, window_bounds = array<i64: 1024, 128>}, {transform_indices = @transform_2, window_bounds = array<i64: 1, 128>}, {transform_indices = @transform_3, window_bounds = array<i64: 1>}, {transform_indices = @transform_4, window_bounds = array<i64: 8, 128>}]} {
    %c0_i32 = arith.constant 0 : i32
    %0 = arith.cmpi eq, %arg2, %c0_i32 : i32
    %1 = arith.extui %0 : i1 to i32
    %c0_i32_0 = arith.constant 0 : i32
    %2 = arith.cmpi ne, %1, %c0_i32_0 : i32
    scf.if %2 {
      %cst_10 = arith.constant 0.000000e+00 : f32
      %13 = vector.broadcast %cst_10 : f32 to vector<8x128xf32>
      %c0_11 = arith.constant 0 : index
      %c0_12 = arith.constant 0 : index
      %14 = vector.load %arg7[%c0_11, %c0_12] : memref<8x128xf32, #tpu.memory_space<vmem>>, vector<8x128xf32>
      tpu.vector_store %arg7[%c0_11, %c0_12], %13 {strides = array<i32>} : memref<8x128xf32, #tpu.memory_space<vmem>>, vector<8x128xf32>,
    } else {
    }
    %c0 = arith.constant 0 : index
    %c0_1 = arith.constant 0 : index
    %3 = vector.load %arg7[%c0, %c0_1] : memref<8x128xf32, #tpu.memory_space<vmem>>, vector<8x128xf32>
    %c0_2 = arith.constant 0 : index
    %c0_3 = arith.constant 0 : index
    %4 = vector.load %arg3[%c0_2, %c0_3] : memref<8x1024xf32, #tpu.memory_space<vmem>>, vector<8x1024xf32>
    %5 = arith.truncf %4 : vector<8x1024xf32> to vector<8x1024xbf16>
    %c0_4 = arith.constant 0 : index
    %c0_5 = arith.constant 0 : index
    %6 = vector.load %arg4[%c0_4, %c0_5] : memref<1024x128xbf16, #tpu.memory_space<vmem>>, vector<1024x128xbf16>
    %cst = arith.constant dense<0.000000e+00> : vector<8x128xf32>
    %7 = tpu.matmul %5, %6, %cst {dimension_numbers = #tpu.dot_dimension_numbers<[1], [0], [0], [1], [0, 0, 1, 1], [], []>} : vector<8x1024xbf16>, vector<1024x128xbf16>, vector<8x128xf32> -> vector<8x128xf32>
    %8 = arith.addf %3, %7 : vector<8x128xf32>
    %c0_6 = arith.constant 0 : index
    %c0_7 = arith.constant 0 : index
    %9 = vector.load %arg7[%c0_6, %c0_7] : memref<8x128xf32, #tpu.memory_space<vmem>>, vector<8x128xf32>
    tpu.vector_store %arg7[%c0_6, %c0_7], %8 {strides = array<i32>} : memref<8x128xf32, #tpu.memory_space<vmem>>, vector<8x128xf32>,
    %c0_i32_8 = arith.constant 0 : i32
    %10 = arith.cmpi eq, %arg2, %c0_i32_8 : i32
    %11 = arith.extui %10 : i1 to i32
    %c0_i32_9 = arith.constant 0 : i32
    %12 = arith.cmpi ne, %11, %c0_i32_9 : i32
    scf.if %12 {
      %c0_10 = arith.constant 0 : index
      %13 = memref.load %arg6[%c0_10] : memref<1xf32, #tpu.memory_space<smem>>
      %cst_11 = arith.constant 1.000000e+00 : f32
      %14 = arith.divf %cst_11, %13 : f32
      %c0_12 = arith.constant 0 : index
      %c0_13 = arith.constant 0 : index
      %15 = vector.load %arg7[%c0_12, %c0_13] : memref<8x128xf32, #tpu.memory_space<vmem>>, vector<8x128xf32>
      %c0_14 = arith.constant 0 : index
      %c0_15 = arith.constant 0 : index
      %16 = vector.load %arg5[%c0_14, %c0_15] : memref<1x128xf32, #tpu.memory_space<vmem>>, vector<1x128xf32>
      %17 = vector.broadcast %16 : vector<1x128xf32> to vector<8x128xf32>
      %18 = arith.addf %15, %17 : vector<8x128xf32>
      %19 = vector.broadcast %14 : f32 to vector<8x128xf32>
      %20 = arith.mulf %18, %19 : vector<8x128xf32>
      %c0_16 = arith.constant 0 : index
      %c0_17 = arith.constant 0 : index
      %21 = vector.load %arg7[%c0_16, %c0_17] : memref<8x128xf32, #tpu.memory_space<vmem>>, vector<8x128xf32>
      tpu.vector_store %arg7[%c0_16, %c0_17], %20 {strides = array<i32>} : memref<8x128xf32, #tpu.memory_space<vmem>>, vector<8x128xf32>,
    } else {
    }
    return
  }
  func.func @transform_0(%arg0: i32, %arg1: i32, %arg2: i32) -> (i32, i32) {
    %c0_i32 = arith.constant 0 : i32
    return %arg0, %arg2 : i32, i32
  }
  func.func @transform_1(%arg0: i32, %arg1: i32, %arg2: i32) -> (i32, i32) {
    %c0_i32 = arith.constant 0 : i32
    return %arg2, %arg1 : i32, i32
  }
  func.func @transform_2(%arg0: i32, %arg1: i32, %arg2: i32) -> (i32, i32) {
    %c0_i32 = arith.constant 0 : i32
    %c0_i32_0 = arith.constant 0 : i32
    return %c0_i32, %arg1 : i32, i32
  }
  func.func @transform_3(%arg0: i32, %arg1: i32, %arg2: i32) -> i32 {
    %c0_i32 = arith.constant 0 : i32
    %c0_i32_0 = arith.constant 0 : i32
    return %c0_i32 : i32
  }
  func.func @transform_4(%arg0: i32, %arg1: i32, %arg2: i32) -> (i32, i32) {
    %c0_i32 = arith.constant 0 : i32
    return %arg0, %arg1 : i32, i32
  }
}

</mosaic_0001>

<llo_original>
// kernel: tpu_custom_call.1
$region0: #{tpu_custom_call.1}
  #allocation0 [shape = 'u32[]', space=smem, size = 0x4, offset = 0x4, fixed_abs, tag = 'smem constant byte address 0x4 - core index']
  #allocation1 [shape = 'u32[72,128]{1,0:T(1,128)}', space=vmem, size = 0x9000, scoped, tag = 'internal scratch']
  #allocation2 [shape = 'f32[1]{0:T(128)S(6)}', space=smem, size = 0x200, scoped, tag = 'scoped memory for tpu_custom_call.1']
  %s0 = inlined_call_operand.hbm [shape: f32[8,1024], index: 0, kind: input, shape index: {}]
  %s1 = inlined_call_operand.hbm [shape: bf16[1024,128], index: 1, kind: input, shape index: {}]
  %s2 = inlined_call_operand.vmem [shape: f32[1,128], index: 2, kind: input, shape index: {}]
  %s3 = inlined_call_operand.<no memory space> [shape: f32[1], index: 3, kind: input, shape index: {}]
  %s4 = inlined_call_operand.hbm [shape: f32[8,128], index: 4, kind: output, shape index: {}]
  %s5 = sld [smem:[#allocation0]]
  $region42: #{tpu_custom_call.1} parent=0
    _
  %s7 = ssub.s32 1, %s5
  %s8 = scalar_select 0, %s7, %s5
  %9 = sst [smem:[#allocation2]] %s3
  $region1: #{tpu_custom_call.1} parent=0
    #allocation3 [shape = 'u8[32768]{0}', space=vmem, size = 0x8000, scoped, tag = 'input window, operand 0, single buffered']
    #allocation4 [shape = 's32[1]{0}', space=sflag, size = 0x4, scoped, tag = 'scoped memory for tpu_custom_call.1']
    #allocation5 [shape = 's32[1]{0}', space=sflag, size = 0x4, scoped, tag = 'scoped memory for tpu_custom_call.1']
    #allocation6 [shape = 'u8[262144]{0}', space=vmem, size = 0x40000, scoped, tag = 'input window, operand 1, single buffered']
    #allocation7 [shape = 's32[1]{0}', space=sflag, size = 0x4, scoped, tag = 'scoped memory for tpu_custom_call.1']
    #allocation8 [shape = 'u8[4096]{0}', space=vmem, size = 0x1000, scoped, tag = 'output window, operand 0, single buffered']
    %10 = vsyncpa [#allocation4], 0
    %11 = vsyncpa [#allocation7], 0
    %12 = vsyncpa [#allocation5], 0
    // Predicated region
    $region2: #{tpu_custom_call.1} parent=1 // pred_check
      _
    $region3: #{tpu_custom_call.1} parent=1 // pred_check_branch
      %14 = sbr.rel (0) target = $region5
    $region4: #{tpu_custom_call.1} parent=1 // pred_region
      %16 = vsyncadd [#allocation4], 0
      %s18 = sshll.u32 %s0, 4
      %s19 = int_to_ptr.hbm [resolvable:$true] %s18
      %s20 = sshll.u32 [#allocation3], 4
      %s21 = int_to_ptr.vmem [resolvable:$true] %s20
      %23 = dma.hbm_to_vmem [thread:$0]  %s19, 1024, %s21, [#allocation4]
    $region5: #{tpu_custom_call.1} parent=1 // pred_fallthru
      _
    // Predicated region
    $region6: #{tpu_custom_call.1} parent=1 // pred_check
      _
    $region7: #{tpu_custom_call.1} parent=1 // pred_check_branch
      %25 = sbr.rel (0) target = $region9
    $region8: #{tpu_custom_call.1} parent=1 // pred_region
      %27 = vsyncadd [#allocation7], 0
      %s28 = sshll.u32 %s1, 4
      %s29 = int_to_ptr.hbm [resolvable:$true] %s28
      %s30 = sshll.u32 [#allocation6], 4
      %s31 = int_to_ptr.vmem [resolvable:$true] %s30
      %36 = dma.hbm_to_vmem [thread:$0]  %s29, 8192, %s31, [#allocation7], 64, 64, 4
    $region9: #{tpu_custom_call.1} parent=1 // pred_fallthru
      _
    // Predicated region
    $region10: #{tpu_custom_call.1} parent=1 // pred_check
      _
    $region11: #{tpu_custom_call.1} parent=1 // pred_check_branch
      %38 = sbr.rel (0) target = $region13
    $region12: #{tpu_custom_call.1} parent=1 // pred_region
      _
    $region13: #{tpu_custom_call.1} parent=1 // pred_fallthru
      _
    // Predicated region
    $region14: #{tpu_custom_call.1} parent=1 // pred_check
      _
    $region15: #{tpu_custom_call.1} parent=1 // pred_check_branch
      %40 = sbr.rel (0) target = $region17
    $region16: #{tpu_custom_call.1} parent=1 // pred_region
      _
    $region17: #{tpu_custom_call.1} parent=1 // pred_fallthru
      _
    // Predicated region
    $region18: #{tpu_custom_call.1} parent=1 // pred_check
      _
    $region19: #{tpu_custom_call.1} parent=1 // pred_check_branch
      %42 = sbr.rel (0) target = $region21
    $region20: #{tpu_custom_call.1} parent=1 // pred_region
      %44 = dma.done [#allocation4], 1024
    $region21: #{tpu_custom_call.1} parent=1 // pred_fallthru
      _
    // Predicated region
    $region22: #{tpu_custom_call.1} parent=1 // pred_check
      _
    $region23: #{tpu_custom_call.1} parent=1 // pred_check_branch
      %46 = sbr.rel (0) target = $region25
    $region24: #{tpu_custom_call.1} parent=1 // pred_region
      %48 = dma.done [#allocation7], 8192
    $region25: #{tpu_custom_call.1} parent=1 // pred_fallthru
      _
    %p49 = scmp.eq.s32.totalorder 0, 0
    // Predicated region
    $region26: #{tpu_custom_call.1} parent=1 // pred_check
      %p50 = pneg %p49
    $region27: #{tpu_custom_call.1} parent=1 // pred_check_branch
      %52 = sbr.rel (%p50) target = $region29
    $region28: #{tpu_custom_call.1} parent=1 // pred_region
      %53 = vst [vmem:[#allocation8] sm:$0xff] 0.0
    $region29: #{tpu_custom_call.1} parent=1 // pred_fallthru
      _
    %v54 = vld [vmem:[#allocation8] sm:$0xff]
    %v55 = vld [vmem:[#allocation3] sm:$0xff]
    %v56 = vld [vmem:[#allocation3 + $0x8] sm:$0xff]
    %v57 = vld [vmem:[#allocation3 + $0x10] sm:$0xff]
    %v58 = vld [vmem:[#allocation3 + $0x18] sm:$0xff]
    %v59 = vld [vmem:[#allocation3 + $0x20] sm:$0xff]
    %v60 = vld [vmem:[#allocation3 + $0x28] sm:$0xff]
    %v61 = vld [vmem:[#allocation3 + $0x30] sm:$0xff]
    %v62 = vld [vmem:[#allocation3 + $0x38] sm:$0xff]
    %v63 = vpack.c.bf16 %v55, %v55
    %v64 = vpack.c.bf16 %v56, %v56
    %v65 = vpack.c.bf16 %v57, %v57
    %v66 = vpack.c.bf16 %v58, %v58
    %v67 = vpack.c.bf16 %v59, %v59
    %v68 = vpack.c.bf16 %v60, %v60
    %v69 = vpack.c.bf16 %v61, %v61
    %v70 = vpack.c.bf16 %v62, %v62
    %v71 = vld [vmem:[#allocation6] sm:$0xf]
    %v72 = vld [vmem:[#allocation6 + $0x4] sm:$0xf]
    %v73 = vld [vmem:[#allocation6 + $0x8] sm:$0xf]
    %v74 = vld [vmem:[#allocation6 + $0xc] sm:$0xf]
    %v75 = vld [vmem:[#allocation6 + $0x10] sm:$0xf]
    %v76 = vld [vmem:[#allocation6 + $0x14] sm:$0xf]
    %v77 = vld [vmem:[#allocation6 + $0x18] sm:$0xf]
    %v78 = vld [vmem:[#allocation6 + $0x1c] sm:$0xf]
    %v79 = vld [vmem:[#allocation6 + $0x20] sm:$0xf]
    %v80 = vld [vmem:[#allocation6 + $0x24] sm:$0xf]
    %v81 = vld [vmem:[#allocation6 + $0x28] sm:$0xf]
    %v82 = vld [vmem:[#allocation6 + $0x2c] sm:$0xf]
    %v83 = vld [vmem:[#allocation6 + $0x30] sm:$0xf]
    %v84 = vld [vmem:[#allocation6 + $0x34] sm:$0xf]
    %v85 = vld [vmem:[#allocation6 + $0x38] sm:$0xf]
    %v86 = vld [vmem:[#allocation6 + $0x3c] sm:$0xf]
    %v87 = vld [vmem:[#allocation6 + $0x40] sm:$0xf]
    %v88 = vld [vmem:[#allocation6 + $0x44] sm:$0xf]
    %v89 = vld [vmem:[#allocation6 + $0x48] sm:$0xf]
    %v90 = vld [vmem:[#allocation6 + $0x4c] sm:$0xf]
    %v91 = vld [vmem:[#allocation6 + $0x50] sm:$0xf]
    %v92 = vld [vmem:[#allocation6 + $0x54] sm:$0xf]
    %v93 = vld [vmem:[#allocation6 + $0x58] sm:$0xf]
    %v94 = vld [vmem:[#allocation6 + $0x5c] sm:$0xf]
    %v95 = vld [vmem:[#allocation6 + $0x60] sm:$0xf]
    %v96 = vld [vmem:[#allocation6 + $0x64] sm:$0xf]
    %v97 = vld [vmem:[#allocation6 + $0x68] sm:$0xf]
    %v98 = vld [vmem:[#allocation6 + $0x6c] sm:$0xf]
    %v99 = vld [vmem:[#allocation6 + $0x70] sm:$0xf]
    %v100 = vld [vmem:[#allocation6 + $0x74] sm:$0xf]
    %v101 = vld [vmem:[#allocation6 + $0x78] sm:$0xf]
    %v102 = vld [vmem:[#allocation6 + $0x7c] sm:$0xf]
    %v103 = vld [vmem:[#allocation6 + $0x80] sm:$0xf]
    %v104 = vld [vmem:[#allocation6 + $0x84] sm:$0xf]
    %v105 = vld [vmem:[#allocation6 + $0x88] sm:$0xf]
    %v106 = vld [vmem:[#allocation6 + $0x8c] sm:$0xf]
    %v107 = vld [vmem:[#allocation6 + $0x90] sm:$0xf]
    %v108 = vld [vmem:[#allocation6 + $0x94] sm:$0xf]
    %v109 = vld [vmem:[#allocation6 + $0x98] sm:$0xf]
    %v110 = vld [vmem:[#allocation6 + $0x9c] sm:$0xf]
    %v111 = vld [vmem:[#allocation6 + $0xa0] sm:$0xf]
    %v112 = vld [vmem:[#allocation6 + $0xa4] sm:$0xf]
    %v113 = vld [vmem:[#allocation6 + $0xa8] sm:$0xf]
    %v114 = vld [vmem:[#allocation6 + $0xac] sm:$0xf]
    %v115 = vld [vmem:[#allocation6 + $0xb0] sm:$0xf]
    %v116 = vld [vmem:[#allocation6 + $0xb4] sm:$0xf]
    %v117 = vld [vmem:[#allocation6 + $0xb8] sm:$0xf]
    %v118 = vld [vmem:[#allocation6 + $0xbc] sm:$0xf]
    %v119 = vld [vmem:[#allocation6 + $0xc0] sm:$0xf]
    %v120 = vld [vmem:[#allocation6 + $0xc4] sm:$0xf]
    %v121 = vld [vmem:[#allocation6 + $0xc8] sm:$0xf]
    %v122 = vld [vmem:[#allocation6 + $0xcc] sm:$0xf]
    %v123 = vld [vmem:[#allocation6 + $0xd0] sm:$0xf]
    %v124 = vld [vmem:[#allocation6 + $0xd4] sm:$0xf]
    %v125 = vld [vmem:[#allocation6 + $0xd8] sm:$0xf]
    %v126 = vld [vmem:[#allocation6 + $0xdc] sm:$0xf]
    %v127 = vld [vmem:[#allocation6 + $0xe0] sm:$0xf]
    %v128 = vld [vmem:[#allocation6 + $0xe4] sm:$0xf]
    %v129 = vld [vmem:[#allocation6 + $0xe8] sm:$0xf]
    %v130 = vld [vmem:[#allocation6 + $0xec] sm:$0xf]
    %v131 = vld [vmem:[#allocation6 + $0xf0] sm:$0xf]
    %v132 = vld [vmem:[#allocation6 + $0xf4] sm:$0xf]
    %v133 = vld [vmem:[#allocation6 + $0xf8] sm:$0xf]
    %v134 = vld [vmem:[#allocation6 + $0xfc] sm:$0xf]
    %v135 = vld [vmem:[#allocation6 + $0x100] sm:$0xf]
    %v136 = vld [vmem:[#allocation6 + $0x104] sm:$0xf]
    %v137 = vld [vmem:[#allocation6 + $0x108] sm:$0xf]
    %v138 = vld [vmem:[#allocation6 + $0x10c] sm:$0xf]
    %v139 = vld [vmem:[#allocation6 + $0x110] sm:$0xf]
    %v140 = vld [vmem:[#allocation6 + $0x114] sm:$0xf]
    %v141 = vld [vmem:[#allocation6 + $0x118] sm:$0xf]
    %v142 = vld [vmem:[#allocation6 + $0x11c] sm:$0xf]
    %v143 = vld [vmem:[#allocation6 + $0x120] sm:$0xf]
    %v144 = vld [vmem:[#allocation6 + $0x124] sm:$0xf]
    %v145 = vld [vmem:[#allocation6 + $0x128] sm:$0xf]
    %v146 = vld [vmem:[#allocation6 + $0x12c] sm:$0xf]
    %v147 = vld [vmem:[#allocation6 + $0x130] sm:$0xf]
    %v148 = vld [vmem:[#allocation6 + $0x134] sm:$0xf]
    %v149 = vld [vmem:[#allocation6 + $0x138] sm:$0xf]
    %v150 = vld [vmem:[#allocation6 + $0x13c] sm:$0xf]
    %v151 = vld [vmem:[#allocation6 + $0x140] sm:$0xf]
    %v152 = vld [vmem:[#allocation6 + $0x144] sm:$0xf]
    %v153 = vld [vmem:[#allocation6 + $0x148] sm:$0xf]
    %v154 = vld [vmem:[#allocation6 + $0x14c] sm:$0xf]
    %v155 = vld [vmem:[#allocation6 + $0x150] sm:$0xf]
    %v156 = vld [vmem:[#allocation6 + $0x154] sm:$0xf]
    %v157 = vld [vmem:[#allocation6 + $0x158] sm:$0xf]
    %v158 = vld [vmem:[#allocation6 + $0x15c] sm:$0xf]
    %v159 = vld [vmem:[#allocation6 + $0x160] sm:$0xf]
    %v160 = vld [vmem:[#allocation6 + $0x164] sm:$0xf]
    %v161 = vld [vmem:[#allocation6 + $0x168] sm:$0xf]
    %v162 = vld [vmem:[#allocation6 + $0x16c] sm:$0xf]
    %v163 = vld [vmem:[#allocation6 + $0x170] sm:$0xf]
    %v164 = vld [vmem:[#allocation6 + $0x174] sm:$0xf]
    %v165 = vld [vmem:[#allocation6 + $0x178] sm:$0xf]
    %v166 = vld [vmem:[#allocation6 + $0x17c] sm:$0xf]
    %v167 = vld [vmem:[#allocation6 + $0x180] sm:$0xf]
    %v168 = vld [vmem:[#allocation6 + $0x184] sm:$0xf]
    %v169 = vld [vmem:[#allocation6 + $0x188] sm:$0xf]
    %v170 = vld [vmem:[#allocation6 + $0x18c] sm:$0xf]
    %v171 = vld [vmem:[#allocation6 + $0x190] sm:$0xf]
    %v172 = vld [vmem:[#allocation6 + $0x194] sm:$0xf]
    %v173 = vld [vmem:[#allocation6 + $0x198] sm:$0xf]
    %v174 = vld [vmem:[#allocation6 + $0x19c] sm:$0xf]
    %v175 = vld [vmem:[#allocation6 + $0x1a0] sm:$0xf]
    %v176 = vld [vmem:[#allocation6 + $0x1a4] sm:$0xf]
    %v177 = vld [vmem:[#allocation6 + $0x1a8] sm:$0xf]
    %v178 = vld [vmem:[#allocation6 + $0x1ac] sm:$0xf]
    %v179 = vld [vmem:[#allocation6 + $0x1b0] sm:$0xf]
    %v180 = vld [vmem:[#allocation6 + $0x1b4] sm:$0xf]
    %v181 = vld [vmem:[#allocation6 + $0x1b8] sm:$0xf]
    %v182 = vld [vmem:[#allocation6 + $0x1bc] sm:$0xf]
    %v183 = vld [vmem:[#allocation6 + $0x1c0] sm:$0xf]
    %v184 = vld [vmem:[#allocation6 + $0x1c4] sm:$0xf]
    %v185 = vld [vmem:[#allocation6 + $0x1c8] sm:$0xf]
    %v186 = vld [vmem:[#allocation6 + $0x1cc] sm:$0xf]
    %v187 = vld [vmem:[#allocation6 + $0x1d0] sm:$0xf]
    %v188 = vld [vmem:[#allocation6 + $0x1d4] sm:$0xf]
    %v189 = vld [vmem:[#allocation6 + $0x1d8] sm:$0xf]
    %v190 = vld [vmem:[#allocation6 + $0x1dc] sm:$0xf]
    %v191 = vld [vmem:[#allocation6 + $0x1e0] sm:$0xf]
    %v192 = vld [vmem:[#allocation6 + $0x1e4] sm:$0xf]
    %v193 = vld [vmem:[#allocation6 + $0x1e8] sm:$0xf]
    %v194 = vld [vmem:[#allocation6 + $0x1ec] sm:$0xf]
    %v195 = vld [vmem:[#allocation6 + $0x1f0] sm:$0xf]
    %v196 = vld [vmem:[#allocation6 + $0x1f4] sm:$0xf]
    %v197 = vld [vmem:[#allocation6 + $0x1f8] sm:$0xf]
    %v198 = vld [vmem:[#allocation6 + $0x1fc] sm:$0xf]
    %v327 = vunpack.c.l.b16 %v71
    %v328 = vunpack.c.l.b16 %v72
    %v329 = vunpack.c.l.b16 %v73
    %v330 = vunpack.c.l.b16 %v74
    %v331 = vunpack.c.l.b16 %v75
    %v332 = vunpack.c.l.b16 %v76
    %v333 = vunpack.c.l.b16 %v77
    %v334 = vunpack.c.l.b16 %v78
    %v335 = vunpack.c.l.b16 %v79
    %v336 = vunpack.c.l.b16 %v80
    %v337 = vunpack.c.l.b16 %v81
    %v338 = vunpack.c.l.b16 %v82
    %v339 = vunpack.c.l.b16 %v83
    %v340 = vunpack.c.l.b16 %v84
    %v341 = vunpack.c.l.b16 %v85
    %v342 = vunpack.c.l.b16 %v86
    %v343 = vunpack.c.l.b16 %v87
    %v344 = vunpack.c.l.b16 %v88
    %v345 = vunpack.c.l.b16 %v89
    %v346 = vunpack.c.l.b16 %v90
    %v347 = vunpack.c.l.b16 %v91
    %v348 = vunpack.c.l.b16 %v92
    %v349 = vunpack.c.l.b16 %v93
    %v350 = vunpack.c.l.b16 %v94
    %v351 = vunpack.c.l.b16 %v95
    %v352 = vunpack.c.l.b16 %v96
    %v353 = vunpack.c.l.b16 %v97
    %v354 = vunpack.c.l.b16 %v98
    %v355 = vunpack.c.l.b16 %v99
    %v356 = vunpack.c.l.b16 %v100
    %v357 = vunpack.c.l.b16 %v101
    %v358 = vunpack.c.l.b16 %v102
    %v359 = vunpack.c.l.b16 %v103
    %v360 = vunpack.c.l.b16 %v104
    %v361 = vunpack.c.l.b16 %v105
    %v362 = vunpack.c.l.b16 %v106
    %v363 = vunpack.c.l.b16 %v107
    %v364 = vunpack.c.l.b16 %v108
    %v365 = vunpack.c.l.b16 %v109
    %v366 = vunpack.c.l.b16 %v110
    %v367 = vunpack.c.l.b16 %v111
    %v368 = vunpack.c.l.b16 %v112
    %v369 = vunpack.c.l.b16 %v113
    %v370 = vunpack.c.l.b16 %v114
    %v371 = vunpack.c.l.b16 %v115
    %v372 = vunpack.c.l.b16 %v116
    %v373 = vunpack.c.l.b16 %v117
    %v374 = vunpack.c.l.b16 %v118
    %v375 = vunpack.c.l.b16 %v119
    %v376 = vunpack.c.l.b16 %v120
    %v377 = vunpack.c.l.b16 %v121
    %v378 = vunpack.c.l.b16 %v122
    %v379 = vunpack.c.l.b16 %v123
    %v380 = vunpack.c.l.b16 %v124
    %v381 = vunpack.c.l.b16 %v125
    %v382 = vunpack.c.l.b16 %v126
    %v383 = vunpack.c.l.b16 %v127
    %v384 = vunpack.c.l.b16 %v128
    %v385 = vunpack.c.l.b16 %v129
    %v386 = vunpack.c.l.b16 %v130
    %v387 = vunpack.c.l.b16 %v131
    %v388 = vunpack.c.l.b16 %v132
    %v389 = vunpack.c.l.b16 %v133
    %v390 = vunpack.c.l.b16 %v134
    %v391 = vunpack.c.l.b16 %v135
    %v392 = vunpack.c.l.b16 %v136
    %v393 = vunpack.c.l.b16 %v137
    %v394 = vunpack.c.l.b16 %v138
    %v395 = vunpack.c.l.b16 %v139
    %v396 = vunpack.c.l.b16 %v140
    %v397 = vunpack.c.l.b16 %v141
    %v398 = vunpack.c.l.b16 %v142
    %v399 = vunpack.c.l.b16 %v143
    %v400 = vunpack.c.l.b16 %v144
    %v401 = vunpack.c.l.b16 %v145
    %v402 = vunpack.c.l.b16 %v146
    %v403 = vunpack.c.l.b16 %v147
    %v404 = vunpack.c.l.b16 %v148
    %v405 = vunpack.c.l.b16 %v149
    %v406 = vunpack.c.l.b16 %v150
    %v407 = vunpack.c.l.b16 %v151
    %v408 = vunpack.c.l.b16 %v152
    %v409 = vunpack.c.l.b16 %v153
    %v410 = vunpack.c.l.b16 %v154
    %v411 = vunpack.c.l.b16 %v155
    %v412 = vunpack.c.l.b16 %v156
    %v413 = vunpack.c.l.b16 %v157
    %v414 = vunpack.c.l.b16 %v158
    %v415 = vunpack.c.l.b16 %v159
    %v416 = vunpack.c.l.b16 %v160
    %v417 = vunpack.c.l.b16 %v161
    %v418 = vunpack.c.l.b16 %v162
    %v419 = vunpack.c.l.b16 %v163
    %v420 = vunpack.c.l.b16 %v164
    %v421 = vunpack.c.l.b16 %v165
    %v422 = vunpack.c.l.b16 %v166
    %v423 = vunpack.c.l.b16 %v167
    %v424 = vunpack.c.l.b16 %v168
    %v425 = vunpack.c.l.b16 %v169
    %v426 = vunpack.c.l.b16 %v170
    %v427 = vunpack.c.l.b16 %v171
    %v428 = vunpack.c.l.b16 %v172
    %v429 = vunpack.c.l.b16 %v173
    %v430 = vunpack.c.l.b16 %v174
    %v431 = vunpack.c.l.b16 %v175
    %v432 = vunpack.c.l.b16 %v176
    %v433 = vunpack.c.l.b16 %v177
    %v434 = vunpack.c.l.b16 %v178
    %v435 = vunpack.c.l.b16 %v179
    %v436 = vunpack.c.l.b16 %v180
    %v437 = vunpack.c.l.b16 %v181
    %v438 = vunpack.c.l.b16 %v182
    %v439 = vunpack.c.l.b16 %v183
    %v440 = vunpack.c.l.b16 %v184
    %v441 = vunpack.c.l.b16 %v185
    %v442 = vunpack.c.l.b16 %v186
    %v443 = vunpack.c.l.b16 %v187
    %v444 = vunpack.c.l.b16 %v188
    %v445 = vunpack.c.l.b16 %v189
    %v446 = vunpack.c.l.b16 %v190
    %v447 = vunpack.c.l.b16 %v191
    %v448 = vunpack.c.l.b16 %v192
    %v449 = vunpack.c.l.b16 %v193
    %v450 = vunpack.c.l.b16 %v194
    %v451 = vunpack.c.l.b16 %v195
    %v452 = vunpack.c.l.b16 %v196
    %v453 = vunpack.c.l.b16 %v197
    %v454 = vunpack.c.l.b16 %v198
    %v455 = vpack.c.b16 %v328, %v327
    %v456 = vpack.c.b16 %v330, %v329
    %v457 = vpack.c.b16 %v332, %v331
    %v458 = vpack.c.b16 %v334, %v333
    %v459 = vpack.c.b16 %v336, %v335
    %v460 = vpack.c.b16 %v338, %v337
    %v461 = vpack.c.b16 %v340, %v339
    %v462 = vpack.c.b16 %v342, %v341
    %v463 = vpack.c.b16 %v344, %v343
    %v464 = vpack.c.b16 %v346, %v345
    %v465 = vpack.c.b16 %v348, %v347
    %v466 = vpack.c.b16 %v350, %v349
    %v467 = vpack.c.b16 %v352, %v351
    %v468 = vpack.c.b16 %v354, %v353
    %v469 = vpack.c.b16 %v356, %v355
    %v470 = vpack.c.b16 %v358, %v357
    %v471 = vpack.c.b16 %v360, %v359
    %v472 = vpack.c.b16 %v362, %v361
    %v473 = vpack.c.b16 %v364, %v363
    %v474 = vpack.c.b16 %v366, %v365
    %v475 = vpack.c.b16 %v368, %v367
    %v476 = vpack.c.b16 %v370, %v369
    %v477 = vpack.c.b16 %v372, %v371
    %v478 = vpack.c.b16 %v374, %v373
    %v479 = vpack.c.b16 %v376, %v375
    %v480 = vpack.c.b16 %v378, %v377
    %v481 = vpack.c.b16 %v380, %v379
    %v482 = vpack.c.b16 %v382, %v381
    %v483 = vpack.c.b16 %v384, %v383
    %v484 = vpack.c.b16 %v386, %v385
    %v485 = vpack.c.b16 %v388, %v387
    %v486 = vpack.c.b16 %v390, %v389
    %v487 = vpack.c.b16 %v392, %v391
    %v488 = vpack.c.b16 %v394, %v393
    %v489 = vpack.c.b16 %v396, %v395
    %v490 = vpack.c.b16 %v398, %v397
    %v491 = vpack.c.b16 %v400, %v399
    %v492 = vpack.c.b16 %v402, %v401
    %v493 = vpack.c.b16 %v404, %v403
    %v494 = vpack.c.b16 %v406, %v405
    %v495 = vpack.c.b16 %v408, %v407
    %v496 = vpack.c.b16 %v410, %v409
    %v497 = vpack.c.b16 %v412, %v411
    %v498 = vpack.c.b16 %v414, %v413
    %v499 = vpack.c.b16 %v416, %v415
    %v500 = vpack.c.b16 %v418, %v417
    %v501 = vpack.c.b16 %v420, %v419
    %v502 = vpack.c.b16 %v422, %v421
    %v503 = vpack.c.b16 %v424, %v423
    %v504 = vpack.c.b16 %v426, %v425
    %v505 = vpack.c.b16 %v428, %v427
    %v506 = vpack.c.b16 %v430, %v429
    %v507 = vpack.c.b16 %v432, %v431
    %v508 = vpack.c.b16 %v434, %v433
    %v509 = vpack.c.b16 %v436, %v435
    %v510 = vpack.c.b16 %v438, %v437
    %v511 = vpack.c.b16 %v440, %v439
    %v512 = vpack.c.b16 %v442, %v441
    %v513 = vpack.c.b16 %v444, %v443
    %v514 = vpack.c.b16 %v446, %v445
    %v515 = vpack.c.b16 %v448, %v447
    %v516 = vpack.c.b16 %v450, %v449
    %v517 = vpack.c.b16 %v452, %v451
    %v518 = vpack.c.b16 %v454, %v453
    %583 = vmatpush.bf16.msra.mxu0 %v462
    %584 = vmatpush.bf16.msra.mxu0 %v461
    %585 = vmatpush.bf16.msra.mxu0 %v460
    %586 = vmatpush.bf16.msra.mxu0 %v459
    %587 = vmatpush.bf16.msra.mxu0 %v458
    %588 = vmatpush.bf16.msra.mxu0 %v457
    %589 = vmatpush.bf16.msra.mxu0 %v456
    %590 = vmatpush.bf16.msra.mxu0 %v455
    %591 = vmatmul.bf16.gmra.mxu0 %v63
    %v592 = vpop.f32.mrf.mxu0
    %v593 = vadd.f32 0.0, %v592
    %v594 = vpop.f32.mrf.mxu0
    %595 = vdwg.mxu0
    %596 = vmatpush.bf16.msra.mxu0 %v470
    %597 = vmatpush.bf16.msra.mxu0 %v469
    %598 = vmatpush.bf16.msra.mxu0 %v468
    %599 = vmatpush.bf16.msra.mxu0 %v467
    %600 = vmatpush.bf16.msra.mxu0 %v466
    %601 = vmatpush.bf16.msra.mxu0 %v465
    %602 = vmatpush.bf16.msra.mxu0 %v464
    %603 = vmatpush.bf16.msra.mxu0 %v463
    %604 = vmatmul.bf16.gmra.mxu0 %v64
    %v605 = vpop.f32.mrf.mxu0
    %v606 = vadd.f32 %v593, %v605
    %v607 = vpop.f32.mrf.mxu0
    %608 = vdwg.mxu0
    %609 = vmatpush.bf16.msra.mxu0 %v478
    %610 = vmatpush.bf16.msra.mxu0 %v477
    %611 = vmatpush.bf16.msra.mxu0 %v476
    %612 = vmatpush.bf16.msra.mxu0 %v475
    %613 = vmatpush.bf16.msra.mxu0 %v474
    %614 = vmatpush.bf16.msra.mxu0 %v473
    %615 = vmatpush.bf16.msra.mxu0 %v472
    %616 = vmatpush.bf16.msra.mxu0 %v471
    %617 = vmatmul.bf16.gmra.mxu0 %v65
    %v618 = vpop.f32.mrf.mxu0
    %v619 = vadd.f32 %v606, %v618
    %v620 = vpop.f32.mrf.mxu0
    %621 = vdwg.mxu0
    %622 = vmatpush.bf16.msra.mxu0 %v486
    %623 = vmatpush.bf16.msra.mxu0 %v485
    %624 = vmatpush.bf16.msra.mxu0 %v484
    %625 = vmatpush.bf16.msra.mxu0 %v483
    %626 = vmatpush.bf16.msra.mxu0 %v482
    %627 = vmatpush.bf16.msra.mxu0 %v481
    %628 = vmatpush.bf16.msra.mxu0 %v480
    %629 = vmatpush.bf16.msra.mxu0 %v479
    %630 = vmatmul.bf16.gmra.mxu0 %v66
    %v631 = vpop.f32.mrf.mxu0
    %v632 = vadd.f32 %v619, %v631
    %v633 = vpop.f32.mrf.mxu0
    %634 = vdwg.mxu0
    %635 = vmatpush.bf16.msra.mxu0 %v494
    %636 = vmatpush.bf16.msra.mxu0 %v493
    %637 = vmatpush.bf16.msra.mxu0 %v492
    %638 = vmatpush.bf16.msra.mxu0 %v491
    %639 = vmatpush.bf16.msra.mxu0 %v490
    %640 = vmatpush.bf16.msra.mxu0 %v489
    %641 = vmatpush.bf16.msra.mxu0 %v488
    %642 = vmatpush.bf16.msra.mxu0 %v487
    %643 = vmatmul.bf16.gmra.mxu0 %v67
    %v644 = vpop.f32.mrf.mxu0
    %v645 = vadd.f32 %v632, %v644
    %v646 = vpop.f32.mrf.mxu0
    %647 = vdwg.mxu0
    %648 = vmatpush.bf16.msra.mxu0 %v502
    %649 = vmatpush.bf16.msra.mxu0 %v501
    %650 = vmatpush.bf16.msra.mxu0 %v500
    %651 = vmatpush.bf16.msra.mxu0 %v499
    %652 = vmatpush.bf16.msra.mxu0 %v498
    %653 = vmatpush.bf16.msra.mxu0 %v497
    %654 = vmatpush.bf16.msra.mxu0 %v496
    %655 = vmatpush.bf16.msra.mxu0 %v495
    %656 = vmatmul.bf16.gmra.mxu0 %v68
    %v657 = vpop.f32.mrf.mxu0
    %v658 = vadd.f32 %v645, %v657
    %v659 = vpop.f32.mrf.mxu0
    %660 = vdwg.mxu0
    %661 = vmatpush.bf16.msra.mxu0 %v510
    %662 = vmatpush.bf16.msra.mxu0 %v509
    %663 = vmatpush.bf16.msra.mxu0 %v508
    %664 = vmatpush.bf16.msra.mxu0 %v507
    %665 = vmatpush.bf16.msra.mxu0 %v506
    %666 = vmatpush.bf16.msra.mxu0 %v505
    %667 = vmatpush.bf16.msra.mxu0 %v504
    %668 = vmatpush.bf16.msra.mxu0 %v503
    %669 = vmatmul.bf16.gmra.mxu0 %v69
    %v670 = vpop.f32.mrf.mxu0
    %v671 = vadd.f32 %v658, %v670
    %v672 = vpop.f32.mrf.mxu0
    %673 = vdwg.mxu0
    %674 = vmatpush.bf16.msra.mxu0 %v518
    %675 = vmatpush.bf16.msra.mxu0 %v517
    %676 = vmatpush.bf16.msra.mxu0 %v516
    %677 = vmatpush.bf16.msra.mxu0 %v515
    %678 = vmatpush.bf16.msra.mxu0 %v514
    %679 = vmatpush.bf16.msra.mxu0 %v513
    %680 = vmatpush.bf16.msra.mxu0 %v512
    %681 = vmatpush.bf16.msra.mxu0 %v511
    %682 = vmatmul.bf16.gmra.mxu0 %v70
    %v683 = vpop.f32.mrf.mxu0
    %v684 = vadd.f32 %v671, %v683
    %v685 = vpop.f32.mrf.mxu0
    %686 = vdwg.mxu0
    %v687 = vadd.f32 %v54, %v684
    %688 = vst [vmem:[#allocation8] sm:$0xff] %v687
    // Predicated region
    $region30: #{tpu_custom_call.1} parent=1 // pred_check
      %p689 = pneg %p49
    $region31: #{tpu_custom_call.1} parent=1 // pred_check_branch
      %691 = sbr.rel (%p689) target = $region33
    $region32: #{tpu_custom_call.1} parent=1 // pred_region
      %s692 = sld [smem:[#allocation2]]
      %v693 = vstv %s692
      %v694 = vrcp.pop %v693
      %v695 = vmul.f32 %v693, %v694
      %v696 = vsub.f32 1.0, %v695
      %v697 = vmul.f32 %v694, %v696
      %v698 = vadd.f32 %v694, %v697
      %vm699 = vweird.f32 %v693
      %vm700 = vweird.f32 %v694
      %vm701 = vmor %vm699, %vm700
      %v702 = vsel %vm701, %v694, %v698
      %v703 = vand.u32 2147483647, %v693
      %vm704 = vcmp.eq.f32.partialorder %v703, 8.507059e+37
      %v705 = vand.u32 %v693, 2147483648
      %v706 = vor.u32 1.1754944e-38, %v705
      %v707 = vsel %vm704, %v706, %v702
      %s708 = vtos %v707
      %v709 = vld [vmem:[#allocation8] sm:$0xff]
      %v710 = vld [vmem:[%s2] sm:$0x1]
      %v712 = vperm.slane %v710, 0
      %v714 = vadd.f32 %v709, %v712
      %v715 = vstv %s708
      %v716 = vmul.f32 %v714, %v715
      %717 = vst [vmem:[#allocation8] sm:$0xff] %v716
    $region33: #{tpu_custom_call.1} parent=1 // pred_fallthru
      _
    // Predicated region
    $region34: #{tpu_custom_call.1} parent=1 // pred_check
      _
    $region35: #{tpu_custom_call.1} parent=1 // pred_check_branch
      %719 = sbr.rel (0) target = $region37
    $region36: #{tpu_custom_call.1} parent=1 // pred_region
      %721 = vsyncadd [#allocation5], 0
      %s723 = sshll.u32 [#allocation8], 4
      %s724 = int_to_ptr.vmem [resolvable:$true] %s723
      %s725 = sshll.u32 %s4, 4
      %s726 = int_to_ptr.hbm [resolvable:$true] %s725
      %728 = dma.vmem_to_hbm [thread:$0]  %s724, 128, %s726, [#allocation5]
    $region37: #{tpu_custom_call.1} parent=1 // pred_fallthru
      _
    // Predicated region
    $region38: #{tpu_custom_call.1} parent=1 // pred_check
      _
    $region39: #{tpu_custom_call.1} parent=1 // pred_check_branch
      %730 = sbr.rel (0) target = $region41
    $region40: #{tpu_custom_call.1} parent=1 // pred_region
      %732 = dma.done [#allocation5], 128
    $region41: #{tpu_custom_call.1} parent=1 // pred_fallthru
      _
    %733 = vsyncpa [#allocation4], 1
    %734 = vsyncpa [#allocation7], 1
    %735 = vsyncpa [#allocation5], 1

</llo_original>
